<compile_context>
chip_gen: v7x
topology: tpu7x:2x2x1
jax: 0.10.0
libtpu: 0.0.40
codegen_flags: <defaults>
</compile_context>

<pallas_src>
import jax
import jax.numpy as jnp
from jax.experimental import pallas as pl
from jax.experimental.pallas import tpu as pltpu


class VmemBudgetError(ValueError):
    """Raised when the fused-MLP resident-VMEM plan cannot fit the budget."""


def _round_up(n, m):
    return ((n + m - 1) // m) * m


def _pad_axis(a, axis, target):
    pad = target - a.shape[axis]
    if pad <= 0:
        return a
    widths = [(0, 0)] * a.ndim
    widths[axis] = (0, pad)
    return jnp.pad(a, widths)


def _tpu_generation_info():
    """Best-effort (VMEM budget, TensorCores/chip); safe defaults if unknown."""
    kind = ""
    try:
        kind = jax.devices()[0].device_kind.lower()
    except Exception:
        pass
    vmem_cap = None
    try:
        info = pltpu.get_tpu_info()
        vmem_cap = getattr(info, "vmem_capacity_bytes", None)
    except Exception:
        vmem_cap = None
    if vmem_cap is None:
        # v7x: 64 MiB per TensorCore; v5e/v6e: 128 MiB.
        vmem_cap = 64 * 1024 * 1024 if "7" in kind else 128 * 1024 * 1024
    num_tc = 2 if ("7" in kind or vmem_cap <= 64 * 1024 * 1024) else 1
    # Leave headroom for Mosaic-internal scratch; ~100 MiB cap on 128 MiB parts.
    vmem_limit = min(int(0.75 * vmem_cap), 100 * 1024 * 1024)
    return vmem_limit, num_tc


def prepare_params(params, *, compute_dtype=jnp.bfloat16):
    """Pad every feature dim to a multiple of 128 (lane-dense) and cast the six
    weight/bias arrays ONCE, outside the per-forward path.  Zero padding is
    exact: padded weight rows/cols and biases are 0 and ReLU(0)=0."""
    w1, b1, w2, b2, w3, b3 = params
    d_in, d_hid = w1.shape
    d_out = w3.shape[1]
    d_in_p, d_hid_p, d_out_p = (_round_up(d, 128) for d in (d_in, d_hid, d_out))

    w1p = _pad_axis(_pad_axis(w1, 0, d_in_p), 1, d_hid_p).astype(compute_dtype)
    w2p = _pad_axis(_pad_axis(w2, 0, d_hid_p), 1, d_hid_p).astype(compute_dtype)
    w3p = _pad_axis(_pad_axis(w3, 0, d_hid_p), 1, d_out_p).astype(compute_dtype)
    b1p = _pad_axis(jnp.reshape(b1, (1, -1)), 1, d_hid_p).astype(jnp.float32)
    b2p = _pad_axis(jnp.reshape(b2, (1, -1)), 1, d_hid_p).astype(jnp.float32)
    b3p = _pad_axis(jnp.reshape(b3, (1, -1)), 1, d_out_p).astype(jnp.float32)

    dims = dict(d_in=d_in, d_hid=d_hid, d_out=d_out,
                d_in_p=d_in_p, d_hid_p=d_hid_p, d_out_p=d_out_p)
    return (w1p, b1p, w2p, b2p, w3p, b3p), dims


def _mlp_kernel(x_ref, w1_ref, b1_ref, w2_ref, b2_ref, w3_ref, b3_ref, o_ref):
    # x_ref: (TB, Din_p) in the caller's dtype (cast to bf16 here, in-kernel).
    # wN_ref: (fan_in_p, fan_out_p) compute dtype; bN_ref: (1, fan_out_p) f32.
    # MXU dots accumulate in f32; bias + ReLU run in f32 on the VPU; the
    # activation is cast back to the compute dtype right after ReLU to halve
    # the live intermediate and stay on the MXU bf16 fast path.
    cdt = w1_ref.dtype
    x = x_ref[...].astype(cdt)

    h = jnp.dot(x, w1_ref[...], preferred_element_type=jnp.float32)
    h = jnp.maximum(h + b1_ref[...], 0.0).astype(cdt)

    h = jnp.dot(h, w2_ref[...], preferred_element_type=jnp.float32)
    h = jnp.maximum(h + b2_ref[...], 0.0).astype(cdt)

    y = jnp.dot(h, w3_ref[...], preferred_element_type=jnp.float32)
    o_ref[...] = (y + b3_ref[...]).astype(o_ref.dtype)


def mlp_forward(x, prepared, dims, *, block_b=None, single_buffer_weights=True,
                vmem_limit_bytes=None, num_tensorcores=None):
    """Fused 3-layer MLP forward.  x: (B, d_in) -> (B, d_out)."""
    w1p, b1p, w2p, b2p, w3p, b3p = prepared
    B, d_in = x.shape
    assert d_in == dims["d_in"]
    d_in_p, d_hid_p, d_out_p = dims["d_in_p"], dims["d_hid_p"], dims["d_out_p"]
    d_out = dims["d_out"]
    out_dtype = x.dtype
    cdt = w1p.dtype

    gen_vmem, gen_tc = _tpu_generation_info()
    if vmem_limit_bytes is None:
        vmem_limit_bytes = gen_vmem
    if num_tensorcores is None:
        num_tensorcores = gen_tc
    if block_b is None:
        # 512-row tiles on 128-MiB single-TC parts (v5e/v6e); 256 on v7x so two
        # grid steps fit the 64-MiB budget and both TCs get work.
        block_b = 512 if vmem_limit_bytes >= 80 * 1024 * 1024 else 256

    # Batch tile: multiple of 16 (bf16 sublane packing), large enough to
    # amortize the ~0.35 us/step overhead and fill the MXU M dimension, but
    # capped so the "parallel" grid has >= num_tensorcores steps when B allows.
    per_core = -(-B // num_tensorcores)
    tb = max(16, min(_round_up(block_b, 16), _round_up(per_core, 16)))

    def vmem_bytes(tile_b):
        n_wbuf = 1 if single_buffer_weights else 2
        itemsize_c = jnp.dtype(cdt).itemsize
        w = n_wbuf * itemsize_c * (d_in_p * d_hid_p + d_hid_p * d_hid_p
                                   + d_hid_p * d_out_p)
        bias = n_wbuf * 4 * (2 * d_hid_p + d_out_p)
        x_buf = 2 * tile_b * d_in_p * x.dtype.itemsize               # double-buffered x
        o_buf = 2 * tile_b * d_out_p * jnp.dtype(out_dtype).itemsize  # double-buffered out
        act = tile_b * d_hid_p * (4 + itemsize_c)                     # f32 dot + bf16 h
        return w + bias + x_buf + o_buf + act

    # Shrink the batch tile (never below 16) if the full footprint won't fit.
    while tb > 16 and vmem_bytes(tb) > vmem_limit_bytes:
        tb = _round_up(tb // 2, 16)
    if vmem_bytes(tb) > vmem_limit_bytes:
        # TODO(synk): for very large hidden dims, add a d_hid K/N tiling grid
        # axis (f32 VMEM accumulator + pl.when init/finalize, axis "arbitrary")
        # instead of requiring all three weights resident in VMEM.
        raise VmemBudgetError(
            f"Fused-MLP VMEM footprint ({vmem_bytes(tb) / 2**20:.1f} MiB) exceeds "
            f"the budget ({vmem_limit_bytes / 2**20:.1f} MiB).")

    # Pad B up to a multiple of tb -> no partial final block, fully unmasked
    # output stores.  x stays in its native dtype (bf16 cast happens in-kernel).
    Bp = _round_up(B, tb)
    xp = _pad_axis(_pad_axis(x, 0, Bp), 1, d_in_p)
    grid = (Bp // tb,)

    def w_spec(shape):
        # Constant index_map -> operand stays resident in VMEM across the grid;
        # a second pipeline buffer would only waste VMEM.
        if single_buffer_weights:
            return pl.BlockSpec(shape, lambda i: (0, 0),
                                pipeline_mode=pl.Buffered(1))
        return pl.BlockSpec(shape, lambda i: (0, 0))

    out_p = pl.pallas_call(
        _mlp_kernel,
        out_shape=jax.ShapeDtypeStruct((Bp, d_out_p), out_dtype),
        grid_spec=pltpu.PrefetchScalarGridSpec(
            num_scalar_prefetch=0,
            grid=grid,
            in_specs=[
                pl.BlockSpec((tb, d_in_p), lambda i: (i, 0)),   # x tile
                w_spec((d_in_p, d_hid_p)),                      # w1
                w_spec((1, d_hid_p)),                           # b1
                w_spec((d_hid_p, d_hid_p)),                     # w2
                w_spec((1, d_hid_p)),                           # b2
                w_spec((d_hid_p, d_out_p)),                     # w3
                w_spec((1, d_out_p)),                           # b3
            ],
            out_specs=pl.BlockSpec((tb, d_out_p), lambda i: (i, 0)),
        ),
        compiler_params=pltpu.CompilerParams(
            dimension_semantics=("parallel",),
            vmem_limit_bytes=vmem_limit_bytes,
        ),
    )(xp, w1p, b1p, w2p, b2p, w3p, b3p)

    # NOTE: for tiny d_out the cheapest option is to let the consumer read the
    # padded slab directly; we slice here to honor the module's contract.
    return out_p[:B, :d_out]


def mlp_reference(x, params, compute_dtype=jnp.bfloat16):
    """Pure-JAX reference with the same precision policy as the kernel."""
    w1, b1, w2, b2, w3, b3 = params
    c = lambda a: a.astype(compute_dtype)
    h = jnp.dot(c(x), c(w1), preferred_element_type=jnp.float32) + b1
    h = jnp.maximum(h, 0.0)
    h = jnp.dot(c(h), c(w2), preferred_element_type=jnp.float32) + b2
    h = jnp.maximum(h, 0.0)
    y = jnp.dot(c(h), c(w3), preferred_element_type=jnp.float32) + b3
    return y.astype(x.dtype)


def init_params(key, input_dim, hidden_dim, output_dim, dtype=jnp.float32):
    """Deterministic init mimicking nn.Linear: U(-1/sqrt(fan_in), 1/sqrt(fan_in))."""
    def linear_init(k, fan_in, fan_out):
        kw, kb = jax.random.split(k)
        bound = 1.0 / jnp.sqrt(jnp.asarray(fan_in, dtype=jnp.float32))
        # stored as (fan_in, fan_out) — transpose of PyTorch's (out, in) layout
        w = jax.random.uniform(kw, (fan_in, fan_out), dtype, -bound, bound)
        b = jax.random.uniform(kb, (1, fan_out), dtype, -bound, bound)
        return w, b

    k1, k2, k3 = jax.random.split(key, 3)
    w1, b1 = linear_init(k1, input_dim, hidden_dim)
    w2, b2 = linear_init(k2, hidden_dim, hidden_dim)
    w3, b3 = linear_init(k3, hidden_dim, output_dim)
    return w1, b1, w2, b2, w3, b3


if __name__ == "__main__":
    input_dim, hidden_dim, output_dim = 32, 64, 16

    key = jax.random.PRNGKey(0)
    kx, kp, kx2 = jax.random.split(key, 3)
    params = init_params(kp, input_dim, hidden_dim, output_dim)

    # Pad/cast the weights exactly once (not per forward call).
    prepped, dims = prepare_params(params)

    fwd_sb = jax.jit(lambda xx: mlp_forward(xx, prepped, dims))
    fwd_db = jax.jit(lambda xx: mlp_forward(xx, prepped, dims,
                                            single_buffer_weights=False))

    def run(xx):
        try:
            return jax.block_until_ready(fwd_sb(xx))
        except VmemBudgetError:
            raise  # genuine budget failure: don't retry with 2x weight VMEM
        except Exception:
            # This jax build may not accept BlockSpec(pipeline_mode=Buffered(1));
            # fall back to default double-buffered resident weights.
            return jax.block_until_ready(fwd_db(xx))

    # Small shape: grid collapses to a single 16-row tile.
    x_small = jax.random.normal(kx, (8, input_dim), dtype=jnp.float32)
    out_small = run(x_small)
    ref_small = mlp_reference(x_small, params)
    assert out_small.shape == (8, output_dim)
    assert jnp.allclose(out_small, ref_small, atol=1e-2, rtol=1e-2)

    # Larger batch: multi-step "parallel" grid (>=2 steps on 2-TC chips).
    x_big = jax.random.normal(kx2, (512, input_dim), dtype=jnp.float32)
    out_big = run(x_big)
    ref_big = mlp_reference(x_big, params)
    assert out_big.shape == (512, output_dim)
    assert jnp.allclose(out_big, ref_big, atol=1e-2, rtol=1e-2)

    print("KERNEL_OK")
</pallas_src>

<mosaic_0001>
module attributes {stable_mosaic.version = 11 : i64} {
  func.func @_mlp_kernel(%arg0: i32, %arg1: memref<16x128xf32, #tpu.memory_space<vmem>>, %arg2: memref<128x128xbf16, #tpu.memory_space<vmem>>, %arg3: memref<1x128xf32, #tpu.memory_space<vmem>>, %arg4: memref<128x128xbf16, #tpu.memory_space<vmem>>, %arg5: memref<1x128xf32, #tpu.memory_space<vmem>>, %arg6: memref<128x128xbf16, #tpu.memory_space<vmem>>, %arg7: memref<1x128xf32, #tpu.memory_space<vmem>>, %arg8: memref<16x128xf32, #tpu.memory_space<vmem>>) attributes {dimension_semantics = [#tpu.dimension_semantics<parallel>], iteration_bounds = array<i64: 1>, scalar_prefetch = 0 : i64, scratch_operands = 0 : i64, tpu.core_type = #tpu.core_type<tc>, window_params = [{transform_indices = @transform_0, window_bounds = array<i64: 16, 128>}, {pipeline_mode = #tpu.pipeline_mode<synchronous>, transform_indices = @transform_1, window_bounds = array<i64: 128, 128>}, {pipeline_mode = #tpu.pipeline_mode<synchronous>, transform_indices = @transform_2, window_bounds = array<i64: 1, 128>}, {pipeline_mode = #tpu.pipeline_mode<synchronous>, transform_indices = @transform_3, window_bounds = array<i64: 128, 128>}, {pipeline_mode = #tpu.pipeline_mode<synchronous>, transform_indices = @transform_4, window_bounds = array<i64: 1, 128>}, {pipeline_mode = #tpu.pipeline_mode<synchronous>, transform_indices = @transform_5, window_bounds = array<i64: 128, 128>}, {pipeline_mode = #tpu.pipeline_mode<synchronous>, transform_indices = @transform_6, window_bounds = array<i64: 1, 128>}, {transform_indices = @transform_7, window_bounds = array<i64: 16, 128>}]} {
    %c0 = arith.constant 0 : index
    %c0_0 = arith.constant 0 : index
    %0 = vector.load %arg1[%c0, %c0_0] : memref<16x128xf32, #tpu.memory_space<vmem>>, vector<16x128xf32>
    %1 = arith.truncf %0 : vector<16x128xf32> to vector<16x128xbf16>
    %c0_1 = arith.constant 0 : index
    %c0_2 = arith.constant 0 : index
    %2 = vector.load %arg2[%c0_1, %c0_2] : memref<128x128xbf16, #tpu.memory_space<vmem>>, vector<128x128xbf16>
    %cst = arith.constant dense<0.000000e+00> : vector<16x128xf32>
    %3 = tpu.matmul %1, %2, %cst {dimension_numbers = #tpu.dot_dimension_numbers<[1], [0], [0], [1], [0, 0, 1, 1], [], []>} : vector<16x128xbf16>, vector<128x128xbf16>, vector<16x128xf32> -> vector<16x128xf32>
    %c0_3 = arith.constant 0 : index
    %c0_4 = arith.constant 0 : index
    %4 = vector.load %arg3[%c0_3, %c0_4] : memref<1x128xf32, #tpu.memory_space<vmem>>, vector<1x128xf32>
    %5 = vector.broadcast %4 : vector<1x128xf32> to vector<16x128xf32>
    %6 = arith.addf %3, %5 : vector<16x128xf32>
    %cst_5 = arith.constant 0.000000e+00 : f32
    %7 = vector.broadcast %cst_5 : f32 to vector<16x128xf32>
    %8 = arith.maximumf %6, %7 : vector<16x128xf32>
    %9 = arith.truncf %8 : vector<16x128xf32> to vector<16x128xbf16>
    %c0_6 = arith.constant 0 : index
    %c0_7 = arith.constant 0 : index
    %10 = vector.load %arg4[%c0_6, %c0_7] : memref<128x128xbf16, #tpu.memory_space<vmem>>, vector<128x128xbf16>
    %cst_8 = arith.constant dense<0.000000e+00> : vector<16x128xf32>
    %11 = tpu.matmul %9, %10, %cst_8 {dimension_numbers = #tpu.dot_dimension_numbers<[1], [0], [0], [1], [0, 0, 1, 1], [], []>} : vector<16x128xbf16>, vector<128x128xbf16>, vector<16x128xf32> -> vector<16x128xf32>
    %c0_9 = arith.constant 0 : index
    %c0_10 = arith.constant 0 : index
    %12 = vector.load %arg5[%c0_9, %c0_10] : memref<1x128xf32, #tpu.memory_space<vmem>>, vector<1x128xf32>
    %13 = vector.broadcast %12 : vector<1x128xf32> to vector<16x128xf32>
    %14 = arith.addf %11, %13 : vector<16x128xf32>
    %cst_11 = arith.constant 0.000000e+00 : f32
    %15 = vector.broadcast %cst_11 : f32 to vector<16x128xf32>
    %16 = arith.maximumf %14, %15 : vector<16x128xf32>
    %17 = arith.truncf %16 : vector<16x128xf32> to vector<16x128xbf16>
    %c0_12 = arith.constant 0 : index
    %c0_13 = arith.constant 0 : index
    %18 = vector.load %arg6[%c0_12, %c0_13] : memref<128x128xbf16, #tpu.memory_space<vmem>>, vector<128x128xbf16>
    %cst_14 = arith.constant dense<0.000000e+00> : vector<16x128xf32>
    %19 = tpu.matmul %17, %18, %cst_14 {dimension_numbers = #tpu.dot_dimension_numbers<[1], [0], [0], [1], [0, 0, 1, 1], [], []>} : vector<16x128xbf16>, vector<128x128xbf16>, vector<16x128xf32> -> vector<16x128xf32>
    %c0_15 = arith.constant 0 : index
    %c0_16 = arith.constant 0 : index
    %20 = vector.load %arg7[%c0_15, %c0_16] : memref<1x128xf32, #tpu.memory_space<vmem>>, vector<1x128xf32>
    %21 = vector.broadcast %20 : vector<1x128xf32> to vector<16x128xf32>
    %22 = arith.addf %19, %21 : vector<16x128xf32>
    %c0_17 = arith.constant 0 : index
    %c0_18 = arith.constant 0 : index
    %23 = vector.load %arg8[%c0_17, %c0_18] : memref<16x128xf32, #tpu.memory_space<vmem>>, vector<16x128xf32>
    tpu.vector_store %arg8[%c0_17, %c0_18], %22 {strides = array<i32>} : memref<16x128xf32, #tpu.memory_space<vmem>>, vector<16x128xf32>,
    return
  }
  func.func @transform_0(%arg0: i32) -> (i32, i32) {
    %c0_i32 = arith.constant 0 : i32
    %c0_i32_0 = arith.constant 0 : i32
    return %arg0, %c0_i32 : i32, i32
  }
  func.func @transform_1(%arg0: i32) -> (i32, i32) {
    %c0_i32 = arith.constant 0 : i32
    %c0_i32_0 = arith.constant 0 : i32
    %c0_i32_1 = arith.constant 0 : i32
    return %c0_i32, %c0_i32_0 : i32, i32
  }
  func.func @transform_2(%arg0: i32) -> (i32, i32) {
    %c0_i32 = arith.constant 0 : i32
    %c0_i32_0 = arith.constant 0 : i32
    %c0_i32_1 = arith.constant 0 : i32
    return %c0_i32, %c0_i32_0 : i32, i32
  }
  func.func @transform_3(%arg0: i32) -> (i32, i32) {
    %c0_i32 = arith.constant 0 : i32
    %c0_i32_0 = arith.constant 0 : i32
    %c0_i32_1 = arith.constant 0 : i32
    return %c0_i32, %c0_i32_0 : i32, i32
  }
  func.func @transform_4(%arg0: i32) -> (i32, i32) {
    %c0_i32 = arith.constant 0 : i32
    %c0_i32_0 = arith.constant 0 : i32
    %c0_i32_1 = arith.constant 0 : i32
    return %c0_i32, %c0_i32_0 : i32, i32
  }
  func.func @transform_5(%arg0: i32) -> (i32, i32) {
    %c0_i32 = arith.constant 0 : i32
    %c0_i32_0 = arith.constant 0 : i32
    %c0_i32_1 = arith.constant 0 : i32
    return %c0_i32, %c0_i32_0 : i32, i32
  }
  func.func @transform_6(%arg0: i32) -> (i32, i32) {
    %c0_i32 = arith.constant 0 : i32
    %c0_i32_0 = arith.constant 0 : i32
    %c0_i32_1 = arith.constant 0 : i32
    return %c0_i32, %c0_i32_0 : i32, i32
  }
  func.func @transform_7(%arg0: i32) -> (i32, i32) {
    %c0_i32 = arith.constant 0 : i32
    %c0_i32_0 = arith.constant 0 : i32
    return %arg0, %c0_i32 : i32, i32
  }
}

module attributes {stable_mosaic.version = 11 : i64} {
  func.func @_mlp_kernel(%arg0: i32, %arg1: memref<16x128xf32, #tpu.memory_space<vmem>>, %arg2: memref<128x128xbf16, #tpu.memory_space<vmem>>, %arg3: memref<1x128xf32, #tpu.memory_space<vmem>>, %arg4: memref<128x128xbf16, #tpu.memory_space<vmem>>, %arg5: memref<1x128xf32, #tpu.memory_space<vmem>>, %arg6: memref<128x128xbf16, #tpu.memory_space<vmem>>, %arg7: memref<1x128xf32, #tpu.memory_space<vmem>>, %arg8: memref<16x128xf32, #tpu.memory_space<vmem>>) attributes {dimension_semantics = [#tpu.dimension_semantics<parallel>], iteration_bounds = array<i64: 1>, scalar_prefetch = 0 : i64, scratch_operands = 0 : i64, tpu.core_type = #tpu.core_type<tc>, window_params = [{transform_indices = @transform_0, window_bounds = array<i64: 16, 128>}, {pipeline_mode = #tpu.pipeline_mode<synchronous>, transform_indices = @transform_1, window_bounds = array<i64: 128, 128>}, {pipeline_mode = #tpu.pipeline_mode<synchronous>, transform_indices = @transform_2, window_bounds = array<i64: 1, 128>}, {pipeline_mode = #tpu.pipeline_mode<synchronous>, transform_indices = @transform_3, window_bounds = array<i64: 128, 128>}, {pipeline_mode = #tpu.pipeline_mode<synchronous>, transform_indices = @transform_4, window_bounds = array<i64: 1, 128>}, {pipeline_mode = #tpu.pipeline_mode<synchronous>, transform_indices = @transform_5, window_bounds = array<i64: 128, 128>}, {pipeline_mode = #tpu.pipeline_mode<synchronous>, transform_indices = @transform_6, window_bounds = array<i64: 1, 128>}, {transform_indices = @transform_7, window_bounds = array<i64: 16, 128>}]} {
    %c0 = arith.constant 0 : index
    %c0_0 = arith.constant 0 : index
    %0 = vector.load %arg1[%c0, %c0_0] : memref<16x128xf32, #tpu.memory_space<vmem>>, vector<16x128xf32>
    %1 = arith.truncf %0 : vector<16x128xf32> to vector<16x128xbf16>
    %c0_1 = arith.constant 0 : index
    %c0_2 = arith.constant 0 : index
    %2 = vector.load %arg2[%c0_1, %c0_2] : memref<128x128xbf16, #tpu.memory_space<vmem>>, vector<128x128xbf16>
    %cst = arith.constant dense<0.000000e+00> : vector<16x128xf32>
    %3 = tpu.matmul %1, %2, %cst {dimension_numbers = #tpu.dot_dimension_numbers<[1], [0], [0], [1], [0, 0, 1, 1], [], []>} : vector<16x128xbf16>, vector<128x128xbf16>, vector<16x128xf32> -> vector<16x128xf32>
    %c0_3 = arith.constant 0 : index
    %c0_4 = arith.constant 0 : index
    %4 = vector.load %arg3[%c0_3, %c0_4] : memref<1x128xf32, #tpu.memory_space<vmem>>, vector<1x128xf32>
    %5 = vector.broadcast %4 : vector<1x128xf32> to vector<16x128xf32>
    %6 = arith.addf %3, %5 : vector<16x128xf32>
    %cst_5 = arith.constant 0.000000e+00 : f32
    %7 = vector.broadcast %cst_5 : f32 to vector<16x128xf32>
    %8 = arith.maximumf %6, %7 : vector<16x128xf32>
    %9 = arith.truncf %8 : vector<16x128xf32> to vector<16x128xbf16>
    %c0_6 = arith.constant 0 : index
    %c0_7 = arith.constant 0 : index
    %10 = vector.load %arg4[%c0_6, %c0_7] : memref<128x128xbf16, #tpu.memory_space<vmem>>, vector<128x128xbf16>
    %cst_8 = arith.constant dense<0.000000e+00> : vector<16x128xf32>
    %11 = tpu.matmul %9, %10, %cst_8 {dimension_numbers = #tpu.dot_dimension_numbers<[1], [0], [0], [1], [0, 0, 1, 1], [], []>} : vector<16x128xbf16>, vector<128x128xbf16>, vector<16x128xf32> -> vector<16x128xf32>
    %c0_9 = arith.constant 0 : index
    %c0_10 = arith.constant 0 : index
    %12 = vector.load %arg5[%c0_9, %c0_10] : memref<1x128xf32, #tpu.memory_space<vmem>>, vector<1x128xf32>
    %13 = vector.broadcast %12 : vector<1x128xf32> to vector<16x128xf32>
    %14 = arith.addf %11, %13 : vector<16x128xf32>
    %cst_11 = arith.constant 0.000000e+00 : f32
    %15 = vector.broadcast %cst_11 : f32 to vector<16x128xf32>
    %16 = arith.maximumf %14, %15 : vector<16x128xf32>
    %17 = arith.truncf %16 : vector<16x128xf32> to vector<16x128xbf16>
    %c0_12 = arith.constant 0 : index
    %c0_13 = arith.constant 0 : index
    %18 = vector.load %arg6[%c0_12, %c0_13] : memref<128x128xbf16, #tpu.memory_space<vmem>>, vector<128x128xbf16>
    %cst_14 = arith.constant dense<0.000000e+00> : vector<16x128xf32>
    %19 = tpu.matmul %17, %18, %cst_14 {dimension_numbers = #tpu.dot_dimension_numbers<[1], [0], [0], [1], [0, 0, 1, 1], [], []>} : vector<16x128xbf16>, vector<128x128xbf16>, vector<16x128xf32> -> vector<16x128xf32>
    %c0_15 = arith.constant 0 : index
    %c0_16 = arith.constant 0 : index
    %20 = vector.load %arg7[%c0_15, %c0_16] : memref<1x128xf32, #tpu.memory_space<vmem>>, vector<1x128xf32>
    %21 = vector.broadcast %20 : vector<1x128xf32> to vector<16x128xf32>
    %22 = arith.addf %19, %21 : vector<16x128xf32>
    %c0_17 = arith.constant 0 : index
    %c0_18 = arith.constant 0 : index
    %23 = vector.load %arg8[%c0_17, %c0_18] : memref<16x128xf32, #tpu.memory_space<vmem>>, vector<16x128xf32>
    tpu.vector_store %arg8[%c0_17, %c0_18], %22 {strides = array<i32>} : memref<16x128xf32, #tpu.memory_space<vmem>>, vector<16x128xf32>,
    return
  }
  func.func @transform_0(%arg0: i32) -> (i32, i32) {
    %c0_i32 = arith.constant 0 : i32
    %c0_i32_0 = arith.constant 0 : i32
    return %arg0, %c0_i32 : i32, i32
  }
  func.func @transform_1(%arg0: i32) -> (i32, i32) {
    %c0_i32 = arith.constant 0 : i32
    %c0_i32_0 = arith.constant 0 : i32
    %c0_i32_1 = arith.constant 0 : i32
    return %c0_i32, %c0_i32_0 : i32, i32
  }
  func.func @transform_2(%arg0: i32) -> (i32, i32) {
    %c0_i32 = arith.constant 0 : i32
    %c0_i32_0 = arith.constant 0 : i32
    %c0_i32_1 = arith.constant 0 : i32
    return %c0_i32, %c0_i32_0 : i32, i32
  }
  func.func @transform_3(%arg0: i32) -> (i32, i32) {
    %c0_i32 = arith.constant 0 : i32
    %c0_i32_0 = arith.constant 0 : i32
    %c0_i32_1 = arith.constant 0 : i32
    return %c0_i32, %c0_i32_0 : i32, i32
  }
  func.func @transform_4(%arg0: i32) -> (i32, i32) {
    %c0_i32 = arith.constant 0 : i32
    %c0_i32_0 = arith.constant 0 : i32
    %c0_i32_1 = arith.constant 0 : i32
    return %c0_i32, %c0_i32_0 : i32, i32
  }
  func.func @transform_5(%arg0: i32) -> (i32, i32) {
    %c0_i32 = arith.constant 0 : i32
    %c0_i32_0 = arith.constant 0 : i32
    %c0_i32_1 = arith.constant 0 : i32
    return %c0_i32, %c0_i32_0 : i32, i32
  }
  func.func @transform_6(%arg0: i32) -> (i32, i32) {
    %c0_i32 = arith.constant 0 : i32
    %c0_i32_0 = arith.constant 0 : i32
    %c0_i32_1 = arith.constant 0 : i32
    return %c0_i32, %c0_i32_0 : i32, i32
  }
  func.func @transform_7(%arg0: i32) -> (i32, i32) {
    %c0_i32 = arith.constant 0 : i32
    %c0_i32_0 = arith.constant 0 : i32
    return %arg0, %c0_i32 : i32, i32
  }
}

</mosaic_0001>

<llo_original>
// kernel: _lambda_.1
$region0: #{_lambda_.1}
  #allocation0 [shape = 'u32[]', space=smem, size = 0x4, offset = 0x4, fixed_abs, tag = 'smem constant byte address 0x4 - core index']
  #allocation1 [shape = 'u32[144,128]{1,0:T(1,128)}', space=vmem, size = 0x12000, scoped, tag = 'internal scratch']
  %s0 = inlined_call_operand.hbm [shape: f32[16,128], index: 0, kind: input, shape index: {}]
  %s1 = inlined_call_operand.hbm [shape: bf16[128,128], index: 1, kind: input, shape index: {}]
  %s2 = inlined_call_operand.hbm [shape: f32[1,128], index: 2, kind: input, shape index: {}]
  %s3 = inlined_call_operand.hbm [shape: bf16[128,128], index: 3, kind: input, shape index: {}]
  %s4 = inlined_call_operand.hbm [shape: f32[1,128], index: 4, kind: input, shape index: {}]
  %s5 = inlined_call_operand.hbm [shape: bf16[128,128], index: 5, kind: input, shape index: {}]
  %s6 = inlined_call_operand.hbm [shape: f32[1,128], index: 6, kind: input, shape index: {}]
  %s7 = inlined_call_operand.hbm [shape: f32[16,128], index: 7, kind: output, shape index: {}]
  %s8 = sld [smem:[#allocation0]]
  $region66: #{_lambda_.1} parent=0
    _
  %s10 = ssub.s32 1, %s8
  %s11 = scalar_select 0, %s10, %s8
  $region1: #{_lambda_.1} parent=0
    #allocation2 [shape = 'u8[8192]{0}', space=vmem, size = 0x2000, scoped, tag = 'input window, operand 0, single buffered']
    #allocation3 [shape = 's32[1]{0}', space=sflag, size = 0x4, scoped, tag = 'scoped memory for _lambda_.1']
    #allocation4 [shape = 's32[1]{0}', space=sflag, size = 0x4, scoped, tag = 'scoped memory for _lambda_.1']
    #allocation5 [shape = 'u8[32768]{0}', space=vmem, size = 0x8000, scoped, tag = 'input window, operand 1, single buffered']
    #allocation6 [shape = 's32[1]{0}', space=sflag, size = 0x4, scoped, tag = 'scoped memory for _lambda_.1']
    #allocation7 [shape = 'u8[512]{0}', space=vmem, size = 0x400, scoped, tag = 'input window, operand 2, single buffered']
    #allocation8 [shape = 'u8[32768]{0}', space=vmem, size = 0x8000, scoped, tag = 'input window, operand 3, single buffered']
    #allocation9 [shape = 's32[1]{0}', space=sflag, size = 0x4, scoped, tag = 'scoped memory for _lambda_.1']
    #allocation10 [shape = 'u8[512]{0}', space=vmem, size = 0x400, scoped, tag = 'input window, operand 4, single buffered']
    #allocation11 [shape = 'u8[32768]{0}', space=vmem, size = 0x8000, scoped, tag = 'input window, operand 5, single buffered']
    #allocation12 [shape = 's32[1]{0}', space=sflag, size = 0x4, scoped, tag = 'scoped memory for _lambda_.1']
    #allocation13 [shape = 'u8[512]{0}', space=vmem, size = 0x400, scoped, tag = 'input window, operand 6, single buffered']
    #allocation14 [shape = 'u8[8192]{0}', space=vmem, size = 0x2000, scoped, tag = 'output window, operand 0, single buffered']
    %12 = vsyncpa [#allocation3], 0
    %13 = vsyncpa [#allocation6], 0
    %14 = vsyncpa [#allocation9], 0
    %15 = vsyncpa [#allocation12], 0
    %16 = vsyncpa [#allocation4], 0
    // Predicated region
    $region2: #{_lambda_.1} parent=1 // pred_check
      _
    $region3: #{_lambda_.1} parent=1 // pred_check_branch
      %18 = sbr.rel (0) target = $region5
    $region4: #{_lambda_.1} parent=1 // pred_region
      %s20 = ssub.s32 256, 256
      %21 = vsyncadd [#allocation3], %s20
      %s22 = sshll.u32 [#allocation2], 4
      %s23 = int_to_ptr.vmem [resolvable:$true] %s22
      %28 = dma.hbm_to_vmem [thread:$0]  %s0, 256, %s23, [#allocation3], 128, 128, 8
    $region5: #{_lambda_.1} parent=1 // pred_fallthru
      _
    // Predicated region
    $region6: #{_lambda_.1} parent=1 // pred_check
      _
    $region7: #{_lambda_.1} parent=1 // pred_check_branch
      %30 = sbr.rel (0) target = $region9
    $region8: #{_lambda_.1} parent=1 // pred_region
      %s32 = ssub.s32 1024, 1024
      %33 = vsyncadd [#allocation6], %s32
      %s34 = sshll.u32 [#allocation5], 4
      %s35 = int_to_ptr.vmem [resolvable:$true] %s34
      %40 = dma.hbm_to_vmem [thread:$0]  %s1, 1024, %s35, [#allocation6], 64, 64, 4
    $region9: #{_lambda_.1} parent=1 // pred_fallthru
      _
    // Predicated region
    $region10: #{_lambda_.1} parent=1 // pred_check
      _
    $region11: #{_lambda_.1} parent=1 // pred_check_branch
      %42 = sbr.rel (0) target = $region13
    $region12: #{_lambda_.1} parent=1 // pred_region
      %s44 = ssub.s32 16, 16
      %45 = vsyncadd [#allocation6], %s44
      %s47 = sshll.u32 [#allocation7], 4
      %s48 = int_to_ptr.vmem [resolvable:$true] %s47
      %50 = dma.hbm_to_vmem [thread:$0]  %s2, 16, %s48, [#allocation6]
    $region13: #{_lambda_.1} parent=1 // pred_fallthru
      _
    // Predicated region
    $region14: #{_lambda_.1} parent=1 // pred_check
      _
    $region15: #{_lambda_.1} parent=1 // pred_check_branch
      %52 = sbr.rel (0) target = $region17
    $region16: #{_lambda_.1} parent=1 // pred_region
      %s54 = ssub.s32 1024, 1024
      %55 = vsyncadd [#allocation9], %s54
      %s56 = sshll.u32 [#allocation8], 4
      %s57 = int_to_ptr.vmem [resolvable:$true] %s56
      %62 = dma.hbm_to_vmem [thread:$0]  %s3, 1024, %s57, [#allocation9], 64, 64, 4
    $region17: #{_lambda_.1} parent=1 // pred_fallthru
      _
    // Predicated region
    $region18: #{_lambda_.1} parent=1 // pred_check
      _
    $region19: #{_lambda_.1} parent=1 // pred_check_branch
      %64 = sbr.rel (0) target = $region21
    $region20: #{_lambda_.1} parent=1 // pred_region
      %s66 = ssub.s32 16, 16
      %67 = vsyncadd [#allocation9], %s66
      %s69 = sshll.u32 [#allocation10], 4
      %s70 = int_to_ptr.vmem [resolvable:$true] %s69
      %72 = dma.hbm_to_vmem [thread:$0]  %s4, 16, %s70, [#allocation9]
    $region21: #{_lambda_.1} parent=1 // pred_fallthru
      _
    // Predicated region
    $region22: #{_lambda_.1} parent=1 // pred_check
      _
    $region23: #{_lambda_.1} parent=1 // pred_check_branch
      %74 = sbr.rel (0) target = $region25
    $region24: #{_lambda_.1} parent=1 // pred_region
      %s76 = ssub.s32 1024, 1024
      %77 = vsyncadd [#allocation12], %s76
      %s78 = sshll.u32 [#allocation11], 4
      %s79 = int_to_ptr.vmem [resolvable:$true] %s78
      %84 = dma.hbm_to_vmem [thread:$0]  %s5, 1024, %s79, [#allocation12], 64, 64, 4
    $region25: #{_lambda_.1} parent=1 // pred_fallthru
      _
    // Predicated region
    $region26: #{_lambda_.1} parent=1 // pred_check
      _
    $region27: #{_lambda_.1} parent=1 // pred_check_branch
      %86 = sbr.rel (0) target = $region29
    $region28: #{_lambda_.1} parent=1 // pred_region
      %s88 = ssub.s32 16, 16
      %89 = vsyncadd [#allocation12], %s88
      %s91 = sshll.u32 [#allocation13], 4
      %s92 = int_to_ptr.vmem [resolvable:$true] %s91
      %94 = dma.hbm_to_vmem [thread:$0]  %s6, 16, %s92, [#allocation12]
    $region29: #{_lambda_.1} parent=1 // pred_fallthru
      _
    // Predicated region
    $region30: #{_lambda_.1} parent=1 // pred_check
      _
    $region31: #{_lambda_.1} parent=1 // pred_check_branch
      %96 = sbr.rel (0) target = $region33
    $region32: #{_lambda_.1} parent=1 // pred_region
      %97 = dma.done [#allocation3], 256
    $region33: #{_lambda_.1} parent=1 // pred_fallthru
      _
    // Predicated region
    $region34: #{_lambda_.1} parent=1 // pred_check
      _
    $region35: #{_lambda_.1} parent=1 // pred_check_branch
      %99 = sbr.rel (0) target = $region37
    $region36: #{_lambda_.1} parent=1 // pred_region
      %100 = dma.done [#allocation6], 1024
    $region37: #{_lambda_.1} parent=1 // pred_fallthru
      _
    // Predicated region
    $region38: #{_lambda_.1} parent=1 // pred_check
      _
    $region39: #{_lambda_.1} parent=1 // pred_check_branch
      %102 = sbr.rel (0) target = $region41
    $region40: #{_lambda_.1} parent=1 // pred_region
      %103 = dma.done [#allocation6], 16
    $region41: #{_lambda_.1} parent=1 // pred_fallthru
      _
    // Predicated region
    $region42: #{_lambda_.1} parent=1 // pred_check
      _
    $region43: #{_lambda_.1} parent=1 // pred_check_branch
      %105 = sbr.rel (0) target = $region45
    $region44: #{_lambda_.1} parent=1 // pred_region
      %106 = dma.done [#allocation9], 1024
    $region45: #{_lambda_.1} parent=1 // pred_fallthru
      _
    // Predicated region
    $region46: #{_lambda_.1} parent=1 // pred_check
      _
    $region47: #{_lambda_.1} parent=1 // pred_check_branch
      %108 = sbr.rel (0) target = $region49
    $region48: #{_lambda_.1} parent=1 // pred_region
      %109 = dma.done [#allocation9], 16
    $region49: #{_lambda_.1} parent=1 // pred_fallthru
      _
    // Predicated region
    $region50: #{_lambda_.1} parent=1 // pred_check
      _
    $region51: #{_lambda_.1} parent=1 // pred_check_branch
      %111 = sbr.rel (0) target = $region53
    $region52: #{_lambda_.1} parent=1 // pred_region
      %112 = dma.done [#allocation12], 1024
    $region53: #{_lambda_.1} parent=1 // pred_fallthru
      _
    // Predicated region
    $region54: #{_lambda_.1} parent=1 // pred_check
      _
    $region55: #{_lambda_.1} parent=1 // pred_check_branch
      %114 = sbr.rel (0) target = $region57
    $region56: #{_lambda_.1} parent=1 // pred_region
      %115 = dma.done [#allocation12], 16
    $region57: #{_lambda_.1} parent=1 // pred_fallthru
      _
    %v117 = vld [vmem:[#allocation2] sm:$0xff]
    %v118 = vld [vmem:[#allocation2 + $0x8] sm:$0xff]
    %v119 = vpack.c.bf16 %v118, %v117
    %v120 = vld [vmem:[#allocation5] sm:$0xf]
    %v121 = vld [vmem:[#allocation5 + $0x4] sm:$0xf]
    %v122 = vld [vmem:[#allocation5 + $0x8] sm:$0xf]
    %v123 = vld [vmem:[#allocation5 + $0xc] sm:$0xf]
    %v124 = vld [vmem:[#allocation5 + $0x10] sm:$0xf]
    %v125 = vld [vmem:[#allocation5 + $0x14] sm:$0xf]
    %v126 = vld [vmem:[#allocation5 + $0x18] sm:$0xf]
    %v127 = vld [vmem:[#allocation5 + $0x1c] sm:$0xf]
    %v128 = vld [vmem:[#allocation5 + $0x20] sm:$0xf]
    %v129 = vld [vmem:[#allocation5 + $0x24] sm:$0xf]
    %v130 = vld [vmem:[#allocation5 + $0x28] sm:$0xf]
    %v131 = vld [vmem:[#allocation5 + $0x2c] sm:$0xf]
    %v132 = vld [vmem:[#allocation5 + $0x30] sm:$0xf]
    %v133 = vld [vmem:[#allocation5 + $0x34] sm:$0xf]
    %v134 = vld [vmem:[#allocation5 + $0x38] sm:$0xf]
    %v135 = vld [vmem:[#allocation5 + $0x3c] sm:$0xf]
    %v136 = vld [vmem:[#allocation7] sm:$0x1]
    %v138 = vlaneseq
    %v139 = vshrl.u32 %v138, 7
    %v140 = vsub.s32 0, %v139
    %v141 = vrot.slane %v136, %v140
    %v159 = vunpack.c.l.b16 %v120
    %v160 = vunpack.c.l.b16 %v121
    %v161 = vunpack.c.l.b16 %v122
    %v162 = vunpack.c.l.b16 %v123
    %v163 = vunpack.c.l.b16 %v124
    %v164 = vunpack.c.l.b16 %v125
    %v165 = vunpack.c.l.b16 %v126
    %v166 = vunpack.c.l.b16 %v127
    %v167 = vunpack.c.l.b16 %v128
    %v168 = vunpack.c.l.b16 %v129
    %v169 = vunpack.c.l.b16 %v130
    %v170 = vunpack.c.l.b16 %v131
    %v171 = vunpack.c.l.b16 %v132
    %v172 = vunpack.c.l.b16 %v133
    %v173 = vunpack.c.l.b16 %v134
    %v174 = vunpack.c.l.b16 %v135
    %v175 = vpack.c.b16 %v160, %v159
    %v176 = vpack.c.b16 %v162, %v161
    %v177 = vpack.c.b16 %v164, %v163
    %v178 = vpack.c.b16 %v166, %v165
    %v179 = vpack.c.b16 %v168, %v167
    %v180 = vpack.c.b16 %v170, %v169
    %v181 = vpack.c.b16 %v172, %v171
    %v182 = vpack.c.b16 %v174, %v173
    %191 = vmatprep.subr.bf16.mxu0 0
    %192 = vmatpush1.bf16.msra.mxu0 %v175
    %193 = vmatprep.subr.bf16.mxu0 0
    %194 = vmatpush1.bf16.msra.mxu0 %v176
    %195 = vmatprep.subr.bf16.mxu0 0
    %196 = vmatpush1.bf16.msra.mxu0 %v177
    %197 = vmatprep.subr.bf16.mxu0 0
    %198 = vmatpush1.bf16.msra.mxu0 %v178
    %199 = vmatprep.subr.bf16.mxu0 0
    %200 = vmatpush1.bf16.msra.mxu0 %v179
    %201 = vmatprep.subr.bf16.mxu0 0
    %202 = vmatpush1.bf16.msra.mxu0 %v180
    %203 = vmatprep.subr.bf16.mxu0 0
    %204 = vmatpush1.bf16.msra.mxu0 %v181
    %205 = vmatprep.subr.bf16.mxu0 0
    %206 = vmatpush1.bf16.msra.mxu0 %v182
    %207 = vmatprep.subr.bf16.mxu0 0
    %208 = vmatpush1.bf16.msra.mxu0 0
    %209 = vmatprep.subr.bf16.mxu0 0
    %210 = vmatpush1.bf16.msra.mxu0 0
    %211 = vmatprep.subr.bf16.mxu0 0
    %212 = vmatpush1.bf16.msra.mxu0 0
    %213 = vmatprep.subr.bf16.mxu0 0
    %214 = vmatpush1.bf16.msra.mxu0 0
    %215 = vmatprep.subr.bf16.mxu0 0
    %216 = vmatpush1.bf16.msra.mxu0 0
    %217 = vmatprep.subr.bf16.mxu0 0
    %218 = vmatpush1.bf16.msra.mxu0 0
    %219 = vmatprep.subr.bf16.mxu0 0
    %220 = vmatpush1.bf16.msra.mxu0 0
    %221 = vmatprep.subr.bf16.mxu0 0
    %222 = vmatpush1.bf16.msra.mxu0 0
    %223 = vmatprep.mubr.bf16.mxu0 0
    %224 = vmatmul.mubr.bf16.gmra.mrb[0].mxu0 %v119
    %v225 = vpop.f32.mrb[0].mxu0
    %v226 = vadd.f32 %v141, %v225
    %v227 = vpop.f32.mrb[0].mxu0
    %v228 = vpop.f32.mrb[0].mxu0
    %v229 = vadd.f32 %v141, %v228
    %v230 = vpop.f32.mrb[0].mxu0
    %231 = vdwg.mxu0
    %v232 = vmax.f32 %v226, 0.0
    %v233 = vmax.f32 %v229, 0.0
    %v234 = vpack.c.bf16 %v233, %v232
    %v235 = vld [vmem:[#allocation8] sm:$0xf]
    %v236 = vld [vmem:[#allocation8 + $0x4] sm:$0xf]
    %v237 = vld [vmem:[#allocation8 + $0x8] sm:$0xf]
    %v238 = vld [vmem:[#allocation8 + $0xc] sm:$0xf]
    %v239 = vld [vmem:[#allocation8 + $0x10] sm:$0xf]
    %v240 = vld [vmem:[#allocation8 + $0x14] sm:$0xf]
    %v241 = vld [vmem:[#allocation8 + $0x18] sm:$0xf]
    %v242 = vld [vmem:[#allocation8 + $0x1c] sm:$0xf]
    %v243 = vld [vmem:[#allocation8 + $0x20] sm:$0xf]
    %v244 = vld [vmem:[#allocation8 + $0x24] sm:$0xf]
    %v245 = vld [vmem:[#allocation8 + $0x28] sm:$0xf]
    %v246 = vld [vmem:[#allocation8 + $0x2c] sm:$0xf]
    %v247 = vld [vmem:[#allocation8 + $0x30] sm:$0xf]
    %v248 = vld [vmem:[#allocation8 + $0x34] sm:$0xf]
    %v249 = vld [vmem:[#allocation8 + $0x38] sm:$0xf]
    %v250 = vld [vmem:[#allocation8 + $0x3c] sm:$0xf]
    %v251 = vld [vmem:[#allocation10] sm:$0x1]
    %v253 = vlaneseq
    %v254 = vshrl.u32 %v253, 7
    %v255 = vsub.s32 0, %v254
    %v256 = vrot.slane %v251, %v255
    %v274 = vunpack.c.l.b16 %v235
    %v275 = vunpack.c.l.b16 %v236
    %v276 = vunpack.c.l.b16 %v237
    %v277 = vunpack.c.l.b16 %v238
    %v278 = vunpack.c.l.b16 %v239
    %v279 = vunpack.c.l.b16 %v240
    %v280 = vunpack.c.l.b16 %v241
    %v281 = vunpack.c.l.b16 %v242
    %v282 = vunpack.c.l.b16 %v243
    %v283 = vunpack.c.l.b16 %v244
    %v284 = vunpack.c.l.b16 %v245
    %v285 = vunpack.c.l.b16 %v246
    %v286 = vunpack.c.l.b16 %v247
    %v287 = vunpack.c.l.b16 %v248
    %v288 = vunpack.c.l.b16 %v249
    %v289 = vunpack.c.l.b16 %v250
    %v290 = vpack.c.b16 %v275, %v274
    %v291 = vpack.c.b16 %v277, %v276
    %v292 = vpack.c.b16 %v279, %v278
    %v293 = vpack.c.b16 %v281, %v280
    %v294 = vpack.c.b16 %v283, %v282
    %v295 = vpack.c.b16 %v285, %v284
    %v296 = vpack.c.b16 %v287, %v286
    %v297 = vpack.c.b16 %v289, %v288
    %306 = vmatprep.subr.bf16.mxu0 0
    %307 = vmatpush1.bf16.msra.mxu0 %v290
    %308 = vmatprep.subr.bf16.mxu0 0
    %309 = vmatpush1.bf16.msra.mxu0 %v291
    %310 = vmatprep.subr.bf16.mxu0 0
    %311 = vmatpush1.bf16.msra.mxu0 %v292
    %312 = vmatprep.subr.bf16.mxu0 0
    %313 = vmatpush1.bf16.msra.mxu0 %v293
    %314 = vmatprep.subr.bf16.mxu0 0
    %315 = vmatpush1.bf16.msra.mxu0 %v294
    %316 = vmatprep.subr.bf16.mxu0 0
    %317 = vmatpush1.bf16.msra.mxu0 %v295
    %318 = vmatprep.subr.bf16.mxu0 0
    %319 = vmatpush1.bf16.msra.mxu0 %v296
    %320 = vmatprep.subr.bf16.mxu0 0
    %321 = vmatpush1.bf16.msra.mxu0 %v297
    %322 = vmatprep.subr.bf16.mxu0 0
    %323 = vmatpush1.bf16.msra.mxu0 0
    %324 = vmatprep.subr.bf16.mxu0 0
    %325 = vmatpush1.bf16.msra.mxu0 0
    %326 = vmatprep.subr.bf16.mxu0 0
    %327 = vmatpush1.bf16.msra.mxu0 0
    %328 = vmatprep.subr.bf16.mxu0 0
    %329 = vmatpush1.bf16.msra.mxu0 0
    %330 = vmatprep.subr.bf16.mxu0 0
    %331 = vmatpush1.bf16.msra.mxu0 0
    %332 = vmatprep.subr.bf16.mxu0 0
    %333 = vmatpush1.bf16.msra.mxu0 0
    %334 = vmatprep.subr.bf16.mxu0 0
    %335 = vmatpush1.bf16.msra.mxu0 0
    %336 = vmatprep.subr.bf16.mxu0 0
    %337 = vmatpush1.bf16.msra.mxu0 0
    %338 = vmatprep.mubr.bf16.mxu0 0
    %339 = vmatmul.mubr.bf16.gmra.mrb[0].mxu0 %v234
    %v340 = vpop.f32.mrb[0].mxu0
    %v341 = vadd.f32 %v256, %v340
    %v342 = vpop.f32.mrb[0].mxu0
    %v343 = vpop.f32.mrb[0].mxu0
    %v344 = vadd.f32 %v256, %v343
    %v345 = vpop.f32.mrb[0].mxu0
    %346 = vdwg.mxu0
    %v347 = vmax.f32 %v341, 0.0
    %v348 = vmax.f32 %v344, 0.0
    %v349 = vpack.c.bf16 %v348, %v347
    %v350 = vld [vmem:[#allocation11] sm:$0xf]
    %v351 = vld [vmem:[#allocation11 + $0x4] sm:$0xf]
    %v352 = vld [vmem:[#allocation11 + $0x8] sm:$0xf]
    %v353 = vld [vmem:[#allocation11 + $0xc] sm:$0xf]
    %v354 = vld [vmem:[#allocation11 + $0x10] sm:$0xf]
    %v355 = vld [vmem:[#allocation11 + $0x14] sm:$0xf]
    %v356 = vld [vmem:[#allocation11 + $0x18] sm:$0xf]
    %v357 = vld [vmem:[#allocation11 + $0x1c] sm:$0xf]
    %v358 = vld [vmem:[#allocation11 + $0x20] sm:$0xf]
    %v359 = vld [vmem:[#allocation11 + $0x24] sm:$0xf]
    %v360 = vld [vmem:[#allocation11 + $0x28] sm:$0xf]
    %v361 = vld [vmem:[#allocation11 + $0x2c] sm:$0xf]
    %v362 = vld [vmem:[#allocation11 + $0x30] sm:$0xf]
    %v363 = vld [vmem:[#allocation11 + $0x34] sm:$0xf]
    %v364 = vld [vmem:[#allocation11 + $0x38] sm:$0xf]
    %v365 = vld [vmem:[#allocation11 + $0x3c] sm:$0xf]
    %v366 = vld [vmem:[#allocation13] sm:$0x1]
    %v368 = vlaneseq
    %v369 = vshrl.u32 %v368, 7
    %v370 = vsub.s32 0, %v369
    %v371 = vrot.slane %v366, %v370
    %v389 = vunpack.c.l.b16 %v350
    %v390 = vunpack.c.l.b16 %v351
    %v391 = vunpack.c.l.b16 %v352
    %v392 = vunpack.c.l.b16 %v353
    %v393 = vunpack.c.l.b16 %v354
    %v394 = vunpack.c.l.b16 %v355
    %v395 = vunpack.c.l.b16 %v356
    %v396 = vunpack.c.l.b16 %v357
    %v397 = vunpack.c.l.b16 %v358
    %v398 = vunpack.c.l.b16 %v359
    %v399 = vunpack.c.l.b16 %v360
    %v400 = vunpack.c.l.b16 %v361
    %v401 = vunpack.c.l.b16 %v362
    %v402 = vunpack.c.l.b16 %v363
    %v403 = vunpack.c.l.b16 %v364
    %v404 = vunpack.c.l.b16 %v365
    %v405 = vpack.c.b16 %v390, %v389
    %v406 = vpack.c.b16 %v392, %v391
    %v407 = vpack.c.b16 %v394, %v393
    %v408 = vpack.c.b16 %v396, %v395
    %v409 = vpack.c.b16 %v398, %v397
    %v410 = vpack.c.b16 %v400, %v399
    %v411 = vpack.c.b16 %v402, %v401
    %v412 = vpack.c.b16 %v404, %v403
    %421 = vmatprep.subr.bf16.mxu0 0
    %422 = vmatpush1.bf16.msra.mxu0 %v405
    %423 = vmatprep.subr.bf16.mxu0 0
    %424 = vmatpush1.bf16.msra.mxu0 %v406
    %425 = vmatprep.subr.bf16.mxu0 0
    %426 = vmatpush1.bf16.msra.mxu0 %v407
    %427 = vmatprep.subr.bf16.mxu0 0
    %428 = vmatpush1.bf16.msra.mxu0 %v408
    %429 = vmatprep.subr.bf16.mxu0 0
    %430 = vmatpush1.bf16.msra.mxu0 %v409
    %431 = vmatprep.subr.bf16.mxu0 0
    %432 = vmatpush1.bf16.msra.mxu0 %v410
    %433 = vmatprep.subr.bf16.mxu0 0
    %434 = vmatpush1.bf16.msra.mxu0 %v411
    %435 = vmatprep.subr.bf16.mxu0 0
    %436 = vmatpush1.bf16.msra.mxu0 %v412
    %437 = vmatprep.subr.bf16.mxu0 0
    %438 = vmatpush1.bf16.msra.mxu0 0
    %439 = vmatprep.subr.bf16.mxu0 0
    %440 = vmatpush1.bf16.msra.mxu0 0
    %441 = vmatprep.subr.bf16.mxu0 0
    %442 = vmatpush1.bf16.msra.mxu0 0
    %443 = vmatprep.subr.bf16.mxu0 0
    %444 = vmatpush1.bf16.msra.mxu0 0
    %445 = vmatprep.subr.bf16.mxu0 0
    %446 = vmatpush1.bf16.msra.mxu0 0
    %447 = vmatprep.subr.bf16.mxu0 0
    %448 = vmatpush1.bf16.msra.mxu0 0
    %449 = vmatprep.subr.bf16.mxu0 0
    %450 = vmatpush1.bf16.msra.mxu0 0
    %451 = vmatprep.subr.bf16.mxu0 0
    %452 = vmatpush1.bf16.msra.mxu0 0
    %453 = vmatprep.mubr.bf16.mxu0 0
    %454 = vmatmul.mubr.bf16.gmra.mrb[0].mxu0 %v349
    %v455 = vpop.f32.mrb[0].mxu0
    %v456 = vadd.f32 %v371, %v455
    %v457 = vpop.f32.mrb[0].mxu0
    %v458 = vpop.f32.mrb[0].mxu0
    %v459 = vadd.f32 %v371, %v458
    %v460 = vpop.f32.mrb[0].mxu0
    %461 = vdwg.mxu0
    %462 = vst [vmem:[#allocation14] sm:$0xff] %v456
    %463 = vst [vmem:[#allocation14 + $0x8] sm:$0xff] %v459
    // Predicated region
    $region58: #{_lambda_.1} parent=1 // pred_check
      _
    $region59: #{_lambda_.1} parent=1 // pred_check_branch
      %465 = sbr.rel (0) target = $region61
    $region60: #{_lambda_.1} parent=1 // pred_region
      %s467 = ssub.s32 256, 256
      %468 = vsyncadd [#allocation4], %s467
      %s469 = sshll.u32 [#allocation14], 4
      %s470 = int_to_ptr.vmem [resolvable:$true] %s469
      %475 = dma.vmem_to_hbm [thread:$0]  %s470, 256, %s7, [#allocation4], 128, 128, 8
    $region61: #{_lambda_.1} parent=1 // pred_fallthru
      _
    // Predicated region
    $region62: #{_lambda_.1} parent=1 // pred_check
      _
    $region63: #{_lambda_.1} parent=1 // pred_check_branch
      %477 = sbr.rel (0) target = $region65
    $region64: #{_lambda_.1} parent=1 // pred_region
      %478 = dma.done [#allocation4], 256
    $region65: #{_lambda_.1} parent=1 // pred_fallthru
      _
    %479 = vsyncpa [#allocation3], 1
    %480 = vsyncpa [#allocation6], 1
    %481 = vsyncpa [#allocation9], 1
    %482 = vsyncpa [#allocation12], 1
    %483 = vsyncpa [#allocation4], 1

// kernel: _lambda_.1
$region0: #{_lambda_.1}
  #allocation0 [shape = 'u32[]', space=smem, size = 0x4, offset = 0x4, fixed_abs, tag = 'smem constant byte address 0x4 - core index']
  #allocation1 [shape = 'u32[144,128]{1,0:T(1,128)}', space=vmem, size = 0x12000, scoped, tag = 'internal scratch']
  %s0 = inlined_call_operand.hbm [shape: f32[16,128], index: 0, kind: input, shape index: {}]
  %s1 = inlined_call_operand.hbm [shape: bf16[128,128], index: 1, kind: input, shape index: {}]
  %s2 = inlined_call_operand.hbm [shape: f32[1,128], index: 2, kind: input, shape index: {}]
  %s3 = inlined_call_operand.hbm [shape: bf16[128,128], index: 3, kind: input, shape index: {}]
  %s4 = inlined_call_operand.hbm [shape: f32[1,128], index: 4, kind: input, shape index: {}]
  %s5 = inlined_call_operand.hbm [shape: bf16[128,128], index: 5, kind: input, shape index: {}]
  %s6 = inlined_call_operand.hbm [shape: f32[1,128], index: 6, kind: input, shape index: {}]
  %s7 = inlined_call_operand.hbm [shape: f32[16,128], index: 7, kind: output, shape index: {}]
  %s8 = sld [smem:[#allocation0]]
  $region66: #{_lambda_.1} parent=0
    _
  %s10 = ssub.s32 1, %s8
  %s11 = scalar_select 0, %s10, %s8
  $region1: #{_lambda_.1} parent=0
    #allocation2 [shape = 'u8[8192]{0}', space=vmem, size = 0x2000, scoped, tag = 'input window, operand 0, single buffered']
    #allocation3 [shape = 's32[1]{0}', space=sflag, size = 0x4, scoped, tag = 'scoped memory for _lambda_.1']
    #allocation4 [shape = 's32[1]{0}', space=sflag, size = 0x4, scoped, tag = 'scoped memory for _lambda_.1']
    #allocation5 [shape = 'u8[32768]{0}', space=vmem, size = 0x8000, scoped, tag = 'input window, operand 1, single buffered']
    #allocation6 [shape = 's32[1]{0}', space=sflag, size = 0x4, scoped, tag = 'scoped memory for _lambda_.1']
    #allocation7 [shape = 'u8[512]{0}', space=vmem, size = 0x400, scoped, tag = 'input window, operand 2, single buffered']
    #allocation8 [shape = 'u8[32768]{0}', space=vmem, size = 0x8000, scoped, tag = 'input window, operand 3, single buffered']
    #allocation9 [shape = 's32[1]{0}', space=sflag, size = 0x4, scoped, tag = 'scoped memory for _lambda_.1']
    #allocation10 [shape = 'u8[512]{0}', space=vmem, size = 0x400, scoped, tag = 'input window, operand 4, single buffered']
    #allocation11 [shape = 'u8[32768]{0}', space=vmem, size = 0x8000, scoped, tag = 'input window, operand 5, single buffered']
    #allocation12 [shape = 's32[1]{0}', space=sflag, size = 0x4, scoped, tag = 'scoped memory for _lambda_.1']
    #allocation13 [shape = 'u8[512]{0}', space=vmem, size = 0x400, scoped, tag = 'input window, operand 6, single buffered']
    #allocation14 [shape = 'u8[8192]{0}', space=vmem, size = 0x2000, scoped, tag = 'output window, operand 0, single buffered']
    %12 = vsyncpa [#allocation3], 0
    %13 = vsyncpa [#allocation6], 0
    %14 = vsyncpa [#allocation9], 0
    %15 = vsyncpa [#allocation12], 0
    %16 = vsyncpa [#allocation4], 0
    // Predicated region
    $region2: #{_lambda_.1} parent=1 // pred_check
      _
    $region3: #{_lambda_.1} parent=1 // pred_check_branch
      %18 = sbr.rel (0) target = $region5
    $region4: #{_lambda_.1} parent=1 // pred_region
      %s20 = ssub.s32 256, 256
      %21 = vsyncadd [#allocation3], %s20
      %s22 = sshll.u32 [#allocation2], 4
      %s23 = int_to_ptr.vmem [resolvable:$true] %s22
      %28 = dma.hbm_to_vmem [thread:$0]  %s0, 256, %s23, [#allocation3], 128, 128, 8
    $region5: #{_lambda_.1} parent=1 // pred_fallthru
      _
    // Predicated region
    $region6: #{_lambda_.1} parent=1 // pred_check
      _
    $region7: #{_lambda_.1} parent=1 // pred_check_branch
      %30 = sbr.rel (0) target = $region9
    $region8: #{_lambda_.1} parent=1 // pred_region
      %s32 = ssub.s32 1024, 1024
      %33 = vsyncadd [#allocation6], %s32
      %s34 = sshll.u32 [#allocation5], 4
      %s35 = int_to_ptr.vmem [resolvable:$true] %s34
      %40 = dma.hbm_to_vmem [thread:$0]  %s1, 1024, %s35, [#allocation6], 64, 64, 4
    $region9: #{_lambda_.1} parent=1 // pred_fallthru
      _
    // Predicated region
    $region10: #{_lambda_.1} parent=1 // pred_check
      _
    $region11: #{_lambda_.1} parent=1 // pred_check_branch
      %42 = sbr.rel (0) target = $region13
    $region12: #{_lambda_.1} parent=1 // pred_region
      %s44 = ssub.s32 16, 16
      %45 = vsyncadd [#allocation6], %s44
      %s47 = sshll.u32 [#allocation7], 4
      %s48 = int_to_ptr.vmem [resolvable:$true] %s47
      %50 = dma.hbm_to_vmem [thread:$0]  %s2, 16, %s48, [#allocation6]
    $region13: #{_lambda_.1} parent=1 // pred_fallthru
      _
    // Predicated region
    $region14: #{_lambda_.1} parent=1 // pred_check
      _
    $region15: #{_lambda_.1} parent=1 // pred_check_branch
      %52 = sbr.rel (0) target = $region17
    $region16: #{_lambda_.1} parent=1 // pred_region
      %s54 = ssub.s32 1024, 1024
      %55 = vsyncadd [#allocation9], %s54
      %s56 = sshll.u32 [#allocation8], 4
      %s57 = int_to_ptr.vmem [resolvable:$true] %s56
      %62 = dma.hbm_to_vmem [thread:$0]  %s3, 1024, %s57, [#allocation9], 64, 64, 4
    $region17: #{_lambda_.1} parent=1 // pred_fallthru
      _
    // Predicated region
    $region18: #{_lambda_.1} parent=1 // pred_check
      _
    $region19: #{_lambda_.1} parent=1 // pred_check_branch
      %64 = sbr.rel (0) target = $region21
    $region20: #{_lambda_.1} parent=1 // pred_region
      %s66 = ssub.s32 16, 16
      %67 = vsyncadd [#allocation9], %s66
      %s69 = sshll.u32 [#allocation10], 4
      %s70 = int_to_ptr.vmem [resolvable:$true] %s69
      %72 = dma.hbm_to_vmem [thread:$0]  %s4, 16, %s70, [#allocation9]
    $region21: #{_lambda_.1} parent=1 // pred_fallthru
      _
    // Predicated region
    $region22: #{_lambda_.1} parent=1 // pred_check
      _
    $region23: #{_lambda_.1} parent=1 // pred_check_branch
      %74 = sbr.rel (0) target = $region25
    $region24: #{_lambda_.1} parent=1 // pred_region
      %s76 = ssub.s32 1024, 1024
      %77 = vsyncadd [#allocation12], %s76
      %s78 = sshll.u32 [#allocation11], 4
      %s79 = int_to_ptr.vmem [resolvable:$true] %s78
      %84 = dma.hbm_to_vmem [thread:$0]  %s5, 1024, %s79, [#allocation12], 64, 64, 4
    $region25: #{_lambda_.1} parent=1 // pred_fallthru
      _
    // Predicated region
    $region26: #{_lambda_.1} parent=1 // pred_check
      _
    $region27: #{_lambda_.1} parent=1 // pred_check_branch
      %86 = sbr.rel (0) target = $region29
    $region28: #{_lambda_.1} parent=1 // pred_region
      %s88 = ssub.s32 16, 16
      %89 = vsyncadd [#allocation12], %s88
      %s91 = sshll.u32 [#allocation13], 4
      %s92 = int_to_ptr.vmem [resolvable:$true] %s91
      %94 = dma.hbm_to_vmem [thread:$0]  %s6, 16, %s92, [#allocation12]
    $region29: #{_lambda_.1} parent=1 // pred_fallthru
      _
    // Predicated region
    $region30: #{_lambda_.1} parent=1 // pred_check
      _
    $region31: #{_lambda_.1} parent=1 // pred_check_branch
      %96 = sbr.rel (0) target = $region33
    $region32: #{_lambda_.1} parent=1 // pred_region
      %97 = dma.done [#allocation3], 256
    $region33: #{_lambda_.1} parent=1 // pred_fallthru
      _
    // Predicated region
    $region34: #{_lambda_.1} parent=1 // pred_check
      _
    $region35: #{_lambda_.1} parent=1 // pred_check_branch
      %99 = sbr.rel (0) target = $region37
    $region36: #{_lambda_.1} parent=1 // pred_region
      %100 = dma.done [#allocation6], 1024
    $region37: #{_lambda_.1} parent=1 // pred_fallthru
      _
    // Predicated region
    $region38: #{_lambda_.1} parent=1 // pred_check
      _
    $region39: #{_lambda_.1} parent=1 // pred_check_branch
      %102 = sbr.rel (0) target = $region41
    $region40: #{_lambda_.1} parent=1 // pred_region
      %103 = dma.done [#allocation6], 16
    $region41: #{_lambda_.1} parent=1 // pred_fallthru
      _
    // Predicated region
    $region42: #{_lambda_.1} parent=1 // pred_check
      _
    $region43: #{_lambda_.1} parent=1 // pred_check_branch
      %105 = sbr.rel (0) target = $region45
    $region44: #{_lambda_.1} parent=1 // pred_region
      %106 = dma.done [#allocation9], 1024
    $region45: #{_lambda_.1} parent=1 // pred_fallthru
      _
    // Predicated region
    $region46: #{_lambda_.1} parent=1 // pred_check
      _
    $region47: #{_lambda_.1} parent=1 // pred_check_branch
      %108 = sbr.rel (0) target = $region49
    $region48: #{_lambda_.1} parent=1 // pred_region
      %109 = dma.done [#allocation9], 16
    $region49: #{_lambda_.1} parent=1 // pred_fallthru
      _
    // Predicated region
    $region50: #{_lambda_.1} parent=1 // pred_check
      _
    $region51: #{_lambda_.1} parent=1 // pred_check_branch
      %111 = sbr.rel (0) target = $region53
    $region52: #{_lambda_.1} parent=1 // pred_region
      %112 = dma.done [#allocation12], 1024
    $region53: #{_lambda_.1} parent=1 // pred_fallthru
      _
    // Predicated region
    $region54: #{_lambda_.1} parent=1 // pred_check
      _
    $region55: #{_lambda_.1} parent=1 // pred_check_branch
      %114 = sbr.rel (0) target = $region57
    $region56: #{_lambda_.1} parent=1 // pred_region
      %115 = dma.done [#allocation12], 16
    $region57: #{_lambda_.1} parent=1 // pred_fallthru
      _
    %v117 = vld [vmem:[#allocation2] sm:$0xff]
    %v118 = vld [vmem:[#allocation2 + $0x8] sm:$0xff]
    %v119 = vpack.c.bf16 %v118, %v117
    %v120 = vld [vmem:[#allocation5] sm:$0xf]
    %v121 = vld [vmem:[#allocation5 + $0x4] sm:$0xf]
    %v122 = vld [vmem:[#allocation5 + $0x8] sm:$0xf]
    %v123 = vld [vmem:[#allocation5 + $0xc] sm:$0xf]
    %v124 = vld [vmem:[#allocation5 + $0x10] sm:$0xf]
    %v125 = vld [vmem:[#allocation5 + $0x14] sm:$0xf]
    %v126 = vld [vmem:[#allocation5 + $0x18] sm:$0xf]
    %v127 = vld [vmem:[#allocation5 + $0x1c] sm:$0xf]
    %v128 = vld [vmem:[#allocation5 + $0x20] sm:$0xf]
    %v129 = vld [vmem:[#allocation5 + $0x24] sm:$0xf]
    %v130 = vld [vmem:[#allocation5 + $0x28] sm:$0xf]
    %v131 = vld [vmem:[#allocation5 + $0x2c] sm:$0xf]
    %v132 = vld [vmem:[#allocation5 + $0x30] sm:$0xf]
    %v133 = vld [vmem:[#allocation5 + $0x34] sm:$0xf]
    %v134 = vld [vmem:[#allocation5 + $0x38] sm:$0xf]
    %v135 = vld [vmem:[#allocation5 + $0x3c] sm:$0xf]
    %v136 = vld [vmem:[#allocation7] sm:$0x1]
    %v138 = vlaneseq
    %v139 = vshrl.u32 %v138, 7
    %v140 = vsub.s32 0, %v139
    %v141 = vrot.slane %v136, %v140
    %v159 = vunpack.c.l.b16 %v120
    %v160 = vunpack.c.l.b16 %v121
    %v161 = vunpack.c.l.b16 %v122
    %v162 = vunpack.c.l.b16 %v123
    %v163 = vunpack.c.l.b16 %v124
    %v164 = vunpack.c.l.b16 %v125
    %v165 = vunpack.c.l.b16 %v126
    %v166 = vunpack.c.l.b16 %v127
    %v167 = vunpack.c.l.b16 %v128
    %v168 = vunpack.c.l.b16 %v129
    %v169 = vunpack.c.l.b16 %v130
    %v170 = vunpack.c.l.b16 %v131
    %v171 = vunpack.c.l.b16 %v132
    %v172 = vunpack.c.l.b16 %v133
    %v173 = vunpack.c.l.b16 %v134
    %v174 = vunpack.c.l.b16 %v135
    %v175 = vpack.c.b16 %v160, %v159
    %v176 = vpack.c.b16 %v162, %v161
    %v177 = vpack.c.b16 %v164, %v163
    %v178 = vpack.c.b16 %v166, %v165
    %v179 = vpack.c.b16 %v168, %v167
    %v180 = vpack.c.b16 %v170, %v169
    %v181 = vpack.c.b16 %v172, %v171
    %v182 = vpack.c.b16 %v174, %v173
    %191 = vmatprep.subr.bf16.mxu0 0
    %192 = vmatpush1.bf16.msra.mxu0 %v175
    %193 = vmatprep.subr.bf16.mxu0 0
    %194 = vmatpush1.bf16.msra.mxu0 %v176
    %195 = vmatprep.subr.bf16.mxu0 0
    %196 = vmatpush1.bf16.msra.mxu0 %v177
    %197 = vmatprep.subr.bf16.mxu0 0
    %198 = vmatpush1.bf16.msra.mxu0 %v178
    %199 = vmatprep.subr.bf16.mxu0 0
    %200 = vmatpush1.bf16.msra.mxu0 %v179
    %201 = vmatprep.subr.bf16.mxu0 0
    %202 = vmatpush1.bf16.msra.mxu0 %v180
    %203 = vmatprep.subr.bf16.mxu0 0
    %204 = vmatpush1.bf16.msra.mxu0 %v181
    %205 = vmatprep.subr.bf16.mxu0 0
    %206 = vmatpush1.bf16.msra.mxu0 %v182
    %207 = vmatprep.subr.bf16.mxu0 0
    %208 = vmatpush1.bf16.msra.mxu0 0
    %209 = vmatprep.subr.bf16.mxu0 0
    %210 = vmatpush1.bf16.msra.mxu0 0
    %211 = vmatprep.subr.bf16.mxu0 0
    %212 = vmatpush1.bf16.msra.mxu0 0
    %213 = vmatprep.subr.bf16.mxu0 0
    %214 = vmatpush1.bf16.msra.mxu0 0
    %215 = vmatprep.subr.bf16.mxu0 0
    %216 = vmatpush1.bf16.msra.mxu0 0
    %217 = vmatprep.subr.bf16.mxu0 0
    %218 = vmatpush1.bf16.msra.mxu0 0
    %219 = vmatprep.subr.bf16.mxu0 0
    %220 = vmatpush1.bf16.msra.mxu0 0
    %221 = vmatprep.subr.bf16.mxu0 0
    %222 = vmatpush1.bf16.msra.mxu0 0
    %223 = vmatprep.mubr.bf16.mxu0 0
    %224 = vmatmul.mubr.bf16.gmra.mrb[0].mxu0 %v119
    %v225 = vpop.f32.mrb[0].mxu0
    %v226 = vadd.f32 %v141, %v225
    %v227 = vpop.f32.mrb[0].mxu0
    %v228 = vpop.f32.mrb[0].mxu0
    %v229 = vadd.f32 %v141, %v228
    %v230 = vpop.f32.mrb[0].mxu0
    %231 = vdwg.mxu0
    %v232 = vmax.f32 %v226, 0.0
    %v233 = vmax.f32 %v229, 0.0
    %v234 = vpack.c.bf16 %v233, %v232
    %v235 = vld [vmem:[#allocation8] sm:$0xf]
    %v236 = vld [vmem:[#allocation8 + $0x4] sm:$0xf]
    %v237 = vld [vmem:[#allocation8 + $0x8] sm:$0xf]
    %v238 = vld [vmem:[#allocation8 + $0xc] sm:$0xf]
    %v239 = vld [vmem:[#allocation8 + $0x10] sm:$0xf]
    %v240 = vld [vmem:[#allocation8 + $0x14] sm:$0xf]
    %v241 = vld [vmem:[#allocation8 + $0x18] sm:$0xf]
    %v242 = vld [vmem:[#allocation8 + $0x1c] sm:$0xf]
    %v243 = vld [vmem:[#allocation8 + $0x20] sm:$0xf]
    %v244 = vld [vmem:[#allocation8 + $0x24] sm:$0xf]
    %v245 = vld [vmem:[#allocation8 + $0x28] sm:$0xf]
    %v246 = vld [vmem:[#allocation8 + $0x2c] sm:$0xf]
    %v247 = vld [vmem:[#allocation8 + $0x30] sm:$0xf]
    %v248 = vld [vmem:[#allocation8 + $0x34] sm:$0xf]
    %v249 = vld [vmem:[#allocation8 + $0x38] sm:$0xf]
    %v250 = vld [vmem:[#allocation8 + $0x3c] sm:$0xf]
    %v251 = vld [vmem:[#allocation10] sm:$0x1]
    %v253 = vlaneseq
    %v254 = vshrl.u32 %v253, 7
    %v255 = vsub.s32 0, %v254
    %v256 = vrot.slane %v251, %v255
    %v274 = vunpack.c.l.b16 %v235
    %v275 = vunpack.c.l.b16 %v236
    %v276 = vunpack.c.l.b16 %v237
    %v277 = vunpack.c.l.b16 %v238
    %v278 = vunpack.c.l.b16 %v239
    %v279 = vunpack.c.l.b16 %v240
    %v280 = vunpack.c.l.b16 %v241
    %v281 = vunpack.c.l.b16 %v242
    %v282 = vunpack.c.l.b16 %v243
    %v283 = vunpack.c.l.b16 %v244
    %v284 = vunpack.c.l.b16 %v245
    %v285 = vunpack.c.l.b16 %v246
    %v286 = vunpack.c.l.b16 %v247
    %v287 = vunpack.c.l.b16 %v248
    %v288 = vunpack.c.l.b16 %v249
    %v289 = vunpack.c.l.b16 %v250
    %v290 = vpack.c.b16 %v275, %v274
    %v291 = vpack.c.b16 %v277, %v276
    %v292 = vpack.c.b16 %v279, %v278
    %v293 = vpack.c.b16 %v281, %v280
    %v294 = vpack.c.b16 %v283, %v282
    %v295 = vpack.c.b16 %v285, %v284
    %v296 = vpack.c.b16 %v287, %v286
    %v297 = vpack.c.b16 %v289, %v288
    %306 = vmatprep.subr.bf16.mxu0 0
    %307 = vmatpush1.bf16.msra.mxu0 %v290
    %308 = vmatprep.subr.bf16.mxu0 0
    %309 = vmatpush1.bf16.msra.mxu0 %v291
    %310 = vmatprep.subr.bf16.mxu0 0
    %311 = vmatpush1.bf16.msra.mxu0 %v292
    %312 = vmatprep.subr.bf16.mxu0 0
    %313 = vmatpush1.bf16.msra.mxu0 %v293
    %314 = vmatprep.subr.bf16.mxu0 0
    %315 = vmatpush1.bf16.msra.mxu0 %v294
    %316 = vmatprep.subr.bf16.mxu0 0
    %317 = vmatpush1.bf16.msra.mxu0 %v295
    %318 = vmatprep.subr.bf16.mxu0 0
    %319 = vmatpush1.bf16.msra.mxu0 %v296
    %320 = vmatprep.subr.bf16.mxu0 0
    %321 = vmatpush1.bf16.msra.mxu0 %v297
    %322 = vmatprep.subr.bf16.mxu0 0
    %323 = vmatpush1.bf16.msra.mxu0 0
    %324 = vmatprep.subr.bf16.mxu0 0
    %325 = vmatpush1.bf16.msra.mxu0 0
    %326 = vmatprep.subr.bf16.mxu0 0
    %327 = vmatpush1.bf16.msra.mxu0 0
    %328 = vmatprep.subr.bf16.mxu0 0
    %329 = vmatpush1.bf16.msra.mxu0 0
    %330 = vmatprep.subr.bf16.mxu0 0
    %331 = vmatpush1.bf16.msra.mxu0 0
    %332 = vmatprep.subr.bf16.mxu0 0
    %333 = vmatpush1.bf16.msra.mxu0 0
    %334 = vmatprep.subr.bf16.mxu0 0
    %335 = vmatpush1.bf16.msra.mxu0 0
    %336 = vmatprep.subr.bf16.mxu0 0
    %337 = vmatpush1.bf16.msra.mxu0 0
    %338 = vmatprep.mubr.bf16.mxu0 0
    %339 = vmatmul.mubr.bf16.gmra.mrb[0].mxu0 %v234
    %v340 = vpop.f32.mrb[0].mxu0
    %v341 = vadd.f32 %v256, %v340
    %v342 = vpop.f32.mrb[0].mxu0
    %v343 = vpop.f32.mrb[0].mxu0
    %v344 = vadd.f32 %v256, %v343
    %v345 = vpop.f32.mrb[0].mxu0
    %346 = vdwg.mxu0
    %v347 = vmax.f32 %v341, 0.0
    %v348 = vmax.f32 %v344, 0.0
    %v349 = vpack.c.bf16 %v348, %v347
    %v350 = vld [vmem:[#allocation11] sm:$0xf]
    %v351 = vld [vmem:[#allocation11 + $0x4] sm:$0xf]
    %v352 = vld [vmem:[#allocation11 + $0x8] sm:$0xf]
    %v353 = vld [vmem:[#allocation11 + $0xc] sm:$0xf]
    %v354 = vld [vmem:[#allocation11 + $0x10] sm:$0xf]
    %v355 = vld [vmem:[#allocation11 + $0x14] sm:$0xf]
    %v356 = vld [vmem:[#allocation11 + $0x18] sm:$0xf]
    %v357 = vld [vmem:[#allocation11 + $0x1c] sm:$0xf]
    %v358 = vld [vmem:[#allocation11 + $0x20] sm:$0xf]
    %v359 = vld [vmem:[#allocation11 + $0x24] sm:$0xf]
    %v360 = vld [vmem:[#allocation11 + $0x28] sm:$0xf]
    %v361 = vld [vmem:[#allocation11 + $0x2c] sm:$0xf]
    %v362 = vld [vmem:[#allocation11 + $0x30] sm:$0xf]
    %v363 = vld [vmem:[#allocation11 + $0x34] sm:$0xf]
    %v364 = vld [vmem:[#allocation11 + $0x38] sm:$0xf]
    %v365 = vld [vmem:[#allocation11 + $0x3c] sm:$0xf]
    %v366 = vld [vmem:[#allocation13] sm:$0x1]
    %v368 = vlaneseq
    %v369 = vshrl.u32 %v368, 7
    %v370 = vsub.s32 0, %v369
    %v371 = vrot.slane %v366, %v370
    %v389 = vunpack.c.l.b16 %v350
    %v390 = vunpack.c.l.b16 %v351
    %v391 = vunpack.c.l.b16 %v352
    %v392 = vunpack.c.l.b16 %v353
    %v393 = vunpack.c.l.b16 %v354
    %v394 = vunpack.c.l.b16 %v355
    %v395 = vunpack.c.l.b16 %v356
    %v396 = vunpack.c.l.b16 %v357
    %v397 = vunpack.c.l.b16 %v358
    %v398 = vunpack.c.l.b16 %v359
    %v399 = vunpack.c.l.b16 %v360
    %v400 = vunpack.c.l.b16 %v361
    %v401 = vunpack.c.l.b16 %v362
    %v402 = vunpack.c.l.b16 %v363
    %v403 = vunpack.c.l.b16 %v364
    %v404 = vunpack.c.l.b16 %v365
    %v405 = vpack.c.b16 %v390, %v389
    %v406 = vpack.c.b16 %v392, %v391
    %v407 = vpack.c.b16 %v394, %v393
    %v408 = vpack.c.b16 %v396, %v395
    %v409 = vpack.c.b16 %v398, %v397
    %v410 = vpack.c.b16 %v400, %v399
    %v411 = vpack.c.b16 %v402, %v401
    %v412 = vpack.c.b16 %v404, %v403
    %421 = vmatprep.subr.bf16.mxu0 0
    %422 = vmatpush1.bf16.msra.mxu0 %v405
    %423 = vmatprep.subr.bf16.mxu0 0
    %424 = vmatpush1.bf16.msra.mxu0 %v406
    %425 = vmatprep.subr.bf16.mxu0 0
    %426 = vmatpush1.bf16.msra.mxu0 %v407
    %427 = vmatprep.subr.bf16.mxu0 0
    %428 = vmatpush1.bf16.msra.mxu0 %v408
    %429 = vmatprep.subr.bf16.mxu0 0
    %430 = vmatpush1.bf16.msra.mxu0 %v409
    %431 = vmatprep.subr.bf16.mxu0 0
    %432 = vmatpush1.bf16.msra.mxu0 %v410
    %433 = vmatprep.subr.bf16.mxu0 0
    %434 = vmatpush1.bf16.msra.mxu0 %v411
    %435 = vmatprep.subr.bf16.mxu0 0
    %436 = vmatpush1.bf16.msra.mxu0 %v412
    %437 = vmatprep.subr.bf16.mxu0 0
    %438 = vmatpush1.bf16.msra.mxu0 0
    %439 = vmatprep.subr.bf16.mxu0 0
    %440 = vmatpush1.bf16.msra.mxu0 0
    %441 = vmatprep.subr.bf16.mxu0 0
    %442 = vmatpush1.bf16.msra.mxu0 0
    %443 = vmatprep.subr.bf16.mxu0 0
    %444 = vmatpush1.bf16.msra.mxu0 0
    %445 = vmatprep.subr.bf16.mxu0 0
    %446 = vmatpush1.bf16.msra.mxu0 0
    %447 = vmatprep.subr.bf16.mxu0 0
    %448 = vmatpush1.bf16.msra.mxu0 0
    %449 = vmatprep.subr.bf16.mxu0 0
    %450 = vmatpush1.bf16.msra.mxu0 0
    %451 = vmatprep.subr.bf16.mxu0 0
    %452 = vmatpush1.bf16.msra.mxu0 0
    %453 = vmatprep.mubr.bf16.mxu0 0
    %454 = vmatmul.mubr.bf16.gmra.mrb[0].mxu0 %v349
    %v455 = vpop.f32.mrb[0].mxu0
    %v456 = vadd.f32 %v371, %v455
    %v457 = vpop.f32.mrb[0].mxu0
    %v458 = vpop.f32.mrb[0].mxu0
    %v459 = vadd.f32 %v371, %v458
    %v460 = vpop.f32.mrb[0].mxu0
    %461 = vdwg.mxu0
    %462 = vst [vmem:[#allocation14] sm:$0xff] %v456
    %463 = vst [vmem:[#allocation14 + $0x8] sm:$0xff] %v459
    // Predicated region
    $region58: #{_lambda_.1} parent=1 // pred_check
      _
    $region59: #{_lambda_.1} parent=1 // pred_check_branch
      %465 = sbr.rel (0) target = $region61
    $region60: #{_lambda_.1} parent=1 // pred_region
      %s467 = ssub.s32 256, 256
      %468 = vsyncadd [#allocation4], %s467
      %s469 = sshll.u32 [#allocation14], 4
      %s470 = int_to_ptr.vmem [resolvable:$true] %s469
      %475 = dma.vmem_to_hbm [thread:$0]  %s470, 256, %s7, [#allocation4], 128, 128, 8
    $region61: #{_lambda_.1} parent=1 // pred_fallthru
      _
    // Predicated region
    $region62: #{_lambda_.1} parent=1 // pred_check
      _
    $region63: #{_lambda_.1} parent=1 // pred_check_branch
      %477 = sbr.rel (0) target = $region65
    $region64: #{_lambda_.1} parent=1 // pred_region
      %478 = dma.done [#allocation4], 256
    $region65: #{_lambda_.1} parent=1 // pred_fallthru
      _
    %479 = vsyncpa [#allocation3], 1
    %480 = vsyncpa [#allocation6], 1
    %481 = vsyncpa [#allocation9], 1
    %482 = vsyncpa [#allocation12], 1
    %483 = vsyncpa [#allocation4], 1

</llo_original>
